<compile_context>
chip_gen: v7x
topology: tpu7x:2x2x1
jax: 0.10.0
libtpu: 0.0.40
codegen_flags: <defaults>
</compile_context>

<pallas_src>
import functools

import jax
import jax.numpy as jnp
from jax.experimental import pallas as pl
from jax.experimental.pallas import tpu as pltpu


# ---------------------------------------------------------------------------
# Pallas kernel: sequential recurrence only (h <- nonlin(z_t + h @ W_h^T))
# ---------------------------------------------------------------------------
def _rnn_recurrent_kernel(z_ref, wh_ref, h0_ref, out_ref, hT_ref, h_sc,
                          *, t_block, hidden, nonlinearity):
    """One RNN layer's recurrence. Grid = (batch_tiles, time_blocks); axis 1 is sequential.

    z_ref  : (NB, T_BLK*H)  precomputed x @ W_i^T + b_i + b_h for this time block
    wh_ref : (H, H)         fc_h weight, transposed (h @ wh == h @ W_h^T)
    h0_ref : (NB, H)        initial hidden state for this batch tile
    out_ref: (NB, T_BLK*H)  hidden states for the T_BLK timesteps (lane-dense slab)
    hT_ref : (NB, H)        final hidden state for this batch tile
    h_sc   : (NB, H) f32    VMEM scratch carrying the hidden state across time blocks
    """
    t = pl.program_id(1)

    @pl.when(t == 0)
    def _():
        h_sc[...] = h0_ref[...].astype(jnp.float32)

    z = z_ref[...].astype(jnp.float32)          # (NB, T_BLK*H)
    wh = wh_ref[...]
    h = h_sc[...]

    hs = []
    for i in range(t_block):                    # small static unroll over the time block
        pre = z[:, i * hidden:(i + 1) * hidden] + jnp.dot(
            h, wh, preferred_element_type=jnp.float32)
        if nonlinearity == "tanh":
            h = jnp.tanh(pre)
        elif nonlinearity == "relu":
            h = jnp.maximum(pre, 0.0)
        else:
            raise ValueError(f"unsupported nonlinearity: {nonlinearity}")
        hs.append(h)

    # One lane-dense store per grid step instead of T_BLK masked (N, H) stores.
    out_ref[...] = jnp.concatenate(hs, axis=-1).astype(out_ref.dtype)
    h_sc[...] = h

    @pl.when(t == pl.num_programs(1) - 1)
    def _():
        hT_ref[...] = h.astype(hT_ref.dtype)


# ---------------------------------------------------------------------------
# Tiling helpers
# ---------------------------------------------------------------------------
def _choose_batch_tile(n):
    # >=2 batch tiles lets the "parallel" grid axis shard across v7x's 2 TensorCores,
    # while keeping each tile's recurrent matmul as full as possible.
    if n >= 16 and n % 16 == 0:
        return n // 2
    return n


def _choose_time_block(seq_len, hidden, batch_tile,
                       itemsize=4, target_block_bytes=2 << 20):
    # Legal time blocks: divide L and give a lane-dense (multiple of 128) slab width,
    # or cover the whole sequence (block == full array dim is always legal).
    legal = [t for t in range(1, seq_len + 1)
             if seq_len % t == 0 and ((t * hidden) % 128 == 0 or t == seq_len)]
    fitting = [t for t in legal
               if batch_tile * t * hidden * itemsize <= target_block_bytes]
    return max(fitting) if fitting else min(legal)


def _vmem_limit_bytes(batch_tile, t_block, hidden, itemsize=4):
    blk = batch_tile * t_block * hidden * itemsize
    need = 2 * blk                              # z block, double-buffered
    need += 2 * blk                             # out block, double-buffered
    need += 2 * hidden * hidden * itemsize      # W_h^T (default double buffer)
    need += 4 * batch_tile * hidden * itemsize  # h0 + hT buffers
    need += batch_tile * hidden * 4             # h scratch
    need *= 2                                   # headroom for compiler temporaries
    # >= default scoped limit (helps v5e's 16 MiB default), < v7x's 64 MiB physical VMEM.
    return int(min(max(need, 32 << 20), 56 << 20))


# ---------------------------------------------------------------------------
# Per-layer pallas_call wrapper
# ---------------------------------------------------------------------------
def _run_rnn_layer(z_flat, wh_t, h0, *, seq_len, hidden, t_block, batch_tile,
                   nonlinearity, out_dtype=jnp.float32):
    n = z_flat.shape[0]
    grid = (n // batch_tile, seq_len // t_block)

    kernel = functools.partial(_rnn_recurrent_kernel, t_block=t_block,
                               hidden=hidden, nonlinearity=nonlinearity)

    out_flat, h_final = pl.pallas_call(
        kernel,
        out_shape=(
            jax.ShapeDtypeStruct((n, seq_len * hidden), out_dtype),
            jax.ShapeDtypeStruct((n, hidden), out_dtype),
        ),
        grid_spec=pltpu.PrefetchScalarGridSpec(
            num_scalar_prefetch=0,
            grid=grid,
            in_specs=[
                # precomputed projection block for this (batch tile, time block)
                pl.BlockSpec((batch_tile, t_block * hidden), lambda b, t: (b, t)),
                # W_h^T and h0 have constant block indices across the time axis, so they
                # are DMA'd only once per batch tile.  (For very large H, pin them with
                # pipeline_mode=pl.Buffered(1) to drop the unused second buffer.)
                pl.BlockSpec((hidden, hidden), lambda b, t: (0, 0)),
                pl.BlockSpec((batch_tile, hidden), lambda b, t: (b, 0)),
            ],
            out_specs=[
                pl.BlockSpec((batch_tile, t_block * hidden), lambda b, t: (b, t)),
                pl.BlockSpec((batch_tile, hidden), lambda b, t: (b, 0)),
            ],
            scratch_shapes=[pltpu.VMEM((batch_tile, hidden), jnp.float32)],
        ),
        compiler_params=pltpu.CompilerParams(
            # batch tiles are independent (megacore-shardable on v7x); time is sequential
            dimension_semantics=("parallel", "arbitrary"),
            vmem_limit_bytes=_vmem_limit_bytes(batch_tile, t_block, hidden),
        ),
    )(z_flat, wh_t, h0)
    return out_flat, h_final


# ---------------------------------------------------------------------------
# Parameters & forward
# ---------------------------------------------------------------------------
def init_rnn_params(key, input_size, hidden_size, num_layers):
    """Matches RNNBase._init_weights: weights ~ U(-H^-0.5, H^-0.5), biases = 0.
    fc_o is created (as in __init__) but unused by forward."""
    bound = hidden_size ** (-0.5)
    params = []
    for _ in range(num_layers):
        key, ki, kh, ko = jax.random.split(key, 4)
        params.append({
            "wi": jax.random.uniform(ki, (hidden_size, input_size), jnp.float32, -bound, bound),
            "bi": jnp.zeros((hidden_size,), jnp.float32),
            "wh": jax.random.uniform(kh, (hidden_size, hidden_size), jnp.float32, -bound, bound),
            "bh": jnp.zeros((hidden_size,), jnp.float32),
            "wo": jax.random.uniform(ko, (hidden_size, hidden_size), jnp.float32, -bound, bound),
            "bo": jnp.zeros((hidden_size,), jnp.float32),
        })
    return params


def rnn_forward(params, inputs, state=None, *, nonlinearity="tanh", t_block=None):
    """inputs: (N, L, D) — PyTorch convention. Returns (output (N, L, H), state (N, H))."""
    n, seq_len, d = inputs.shape
    hidden = params[0]["wh"].shape[0]
    if len(params) > 1 and d != hidden:
        # Inherited from the reference module: every layer's fc_i is (input_size -> hidden).
        raise ValueError("stacked layers require input_size == hidden_size "
                         "(as in the reference module)")
    if state is None:
        state = jnp.zeros((n, hidden), jnp.float32)
    state = state.astype(jnp.float32)

    batch_tile = _choose_batch_tile(n)
    tb = t_block if t_block is not None else _choose_time_block(seq_len, hidden, batch_tile)
    if seq_len % tb != 0 or ((tb * hidden) % 128 != 0 and tb != seq_len):
        raise ValueError(f"invalid time block {tb} for (L={seq_len}, H={hidden})")

    x = inputs.astype(jnp.float32)                   # (N, L, D), batch-major — no transposes
    for layer in params:
        # Hoisted input projection: one large, fully parallel (N*L, D)x(D, H) MXU matmul,
        # with both biases folded in, so the sequential loop only does h @ W_h^T.
        z = jnp.einsum("nld,dh->nlh", x, jnp.transpose(layer["wi"]),
                       preferred_element_type=jnp.float32)
        z = z + (layer["bi"] + layer["bh"])[None, None, :]
        z_flat = z.reshape(n, seq_len * hidden)      # contiguous reshape — free

        out_flat, state = _run_rnn_layer(
            z_flat, jnp.transpose(layer["wh"]), state,
            seq_len=seq_len, hidden=hidden, t_block=tb, batch_tile=batch_tile,
            nonlinearity=nonlinearity)
        x = out_flat.reshape(n, seq_len, hidden)     # feeds the next layer
        # TODO(synk): fuse the per-layer loop into one pallas_call
        # (grid=(num_layers, batch, time)) with the activation slab resident in VMEM to
        # avoid the inter-layer HBM round trip on large (L, N, H).
    return x, state


# ---------------------------------------------------------------------------
# Pure-JAX reference (mirrors the PyTorch forward loop) for a correctness check
# ---------------------------------------------------------------------------
def _reference_forward(params, inputs, state=None, *, nonlinearity="tanh"):
    n, seq_len, _ = inputs.shape
    hidden = params[0]["wh"].shape[0]
    if state is None:
        state = jnp.zeros((n, hidden), jnp.float32)
    nl = jnp.tanh if nonlinearity == "tanh" else (lambda v: jnp.maximum(v, 0.0))
    x = inputs.astype(jnp.float32)
    for layer in params:
        outs = []
        for t in range(seq_len):
            pre = (x[:, t, :] @ layer["wi"].T + layer["bi"]
                   + state @ layer["wh"].T + layer["bh"])
            state = nl(pre)
            outs.append(state)
        x = jnp.stack(outs, axis=1)
    return x, state


if __name__ == "__main__":
    # Small shapes consistent with the module; input_size == hidden_size so that
    # multi-layer stacking is well-formed (exactly as the PyTorch reference requires).
    N, L = 2, 8
    input_size = hidden_size = 32
    num_layers = 2

    key = jax.random.PRNGKey(0)
    kp, kx = jax.random.split(key)
    params = init_rnn_params(kp, input_size, hidden_size, num_layers)
    x = jax.random.normal(kx, (N, L, input_size), jnp.float32)

    # Run 1: tanh, explicit t_block=4 -> lane-dense 128-wide output slabs,
    # grid = (1 batch tile, 2 time blocks) exercises the multi-step recurrence pipeline.
    out, hT = rnn_forward(params, x, nonlinearity="tanh", t_block=4)
    out = jax.block_until_ready(out)
    hT = jax.block_until_ready(hT)
    ref_out, ref_hT = _reference_forward(params, x, nonlinearity="tanh")
    assert out.shape == (N, L, hidden_size) and hT.shape == (N, hidden_size)
    assert jnp.allclose(out, ref_out, atol=1e-4, rtol=1e-4)
    assert jnp.allclose(hT, ref_hT, atol=1e-4, rtol=1e-4)

    # Run 2: relu, auto-chosen time block (whole sequence in one block here).
    out2, hT2 = rnn_forward(params, x, nonlinearity="relu")
    out2 = jax.block_until_ready(out2)
    hT2 = jax.block_until_ready(hT2)
    ref_out2, ref_hT2 = _reference_forward(params, x, nonlinearity="relu")
    assert jnp.allclose(out2, ref_out2, atol=1e-4, rtol=1e-4)
    assert jnp.allclose(hT2, ref_hT2, atol=1e-4, rtol=1e-4)

    print("KERNEL_OK")
</pallas_src>

<mosaic_0001>
module attributes {stable_mosaic.version = 11 : i64} {
  func.func @_rnn_recurrent_kernel(%arg0: i32, %arg1: i32, %arg2: memref<2x128xf32, #tpu.memory_space<vmem>>, %arg3: memref<32x32xf32, #tpu.memory_space<vmem>>, %arg4: memref<2x32xf32, #tpu.memory_space<vmem>>, %arg5: memref<2x128xf32, #tpu.memory_space<vmem>>, %arg6: memref<2x32xf32, #tpu.memory_space<vmem>>, %arg7: memref<2x32xf32, #tpu.memory_space<vmem>>) attributes {dimension_semantics = [#tpu.dimension_semantics<parallel>, #tpu.dimension_semantics<arbitrary>], iteration_bounds = array<i64: 1, 2>, scalar_prefetch = 0 : i64, scratch_operands = 1 : i64, tpu.core_type = #tpu.core_type<tc>, window_params = [{transform_indices = @transform_0, window_bounds = array<i64: 2, 128>}, {pipeline_mode = #tpu.pipeline_mode<synchronous>, transform_indices = @transform_1, window_bounds = array<i64: 32, 32>}, {transform_indices = @transform_2, window_bounds = array<i64: 2, 32>}, {transform_indices = @transform_3, window_bounds = array<i64: 2, 128>}, {transform_indices = @transform_4, window_bounds = array<i64: 2, 32>}]} {
    %c0_i32 = arith.constant 0 : i32
    %0 = arith.cmpi eq, %arg1, %c0_i32 : i32
    %1 = arith.extui %0 : i1 to i32
    %c0_i32_0 = arith.constant 0 : i32
    %2 = arith.cmpi ne, %1, %c0_i32_0 : i32
    scf.if %2 {
      %c0_14 = arith.constant 0 : index
      %c0_15 = arith.constant 0 : index
      %28 = vector.load %arg4[%c0_14, %c0_15] : memref<2x32xf32, #tpu.memory_space<vmem>>, vector<2x32xf32>
      %c0_16 = arith.constant 0 : index
      %c0_17 = arith.constant 0 : index
      %29 = vector.load %arg7[%c0_16, %c0_17] : memref<2x32xf32, #tpu.memory_space<vmem>>, vector<2x32xf32>
      tpu.vector_store %arg7[%c0_16, %c0_17], %28 {strides = array<i32>} : memref<2x32xf32, #tpu.memory_space<vmem>>, vector<2x32xf32>,
    } else {
    }
    %c0 = arith.constant 0 : index
    %c0_1 = arith.constant 0 : index
    %3 = vector.load %arg2[%c0, %c0_1] : memref<2x128xf32, #tpu.memory_space<vmem>>, vector<2x128xf32>
    %c0_2 = arith.constant 0 : index
    %c0_3 = arith.constant 0 : index
    %4 = vector.load %arg3[%c0_2, %c0_3] : memref<32x32xf32, #tpu.memory_space<vmem>>, vector<32x32xf32>
    %c0_4 = arith.constant 0 : index
    %c0_5 = arith.constant 0 : index
    %5 = vector.load %arg7[%c0_4, %c0_5] : memref<2x32xf32, #tpu.memory_space<vmem>>, vector<2x32xf32>
    %6 = vector.extract_strided_slice %3 {offsets = [0, 0], sizes = [2, 32], strides = [1, 1]} : vector<2x128xf32> to vector<2x32xf32>
    %cst = arith.constant dense<0.000000e+00> : vector<2x32xf32>
    %7 = tpu.matmul %5, %4, %cst {dimension_numbers = #tpu.dot_dimension_numbers<[1], [0], [0], [1], [0, 0, 1, 1], [], []>} : vector<2x32xf32>, vector<32x32xf32>, vector<2x32xf32> -> vector<2x32xf32>
    %8 = arith.addf %6, %7 : vector<2x32xf32>
    %9 = math.tanh %8 : vector<2x32xf32>
    %10 = vector.extract_strided_slice %3 {offsets = [0, 32], sizes = [2, 32], strides = [1, 1]} : vector<2x128xf32> to vector<2x32xf32>
    %cst_6 = arith.constant dense<0.000000e+00> : vector<2x32xf32>
    %11 = tpu.matmul %9, %4, %cst_6 {dimension_numbers = #tpu.dot_dimension_numbers<[1], [0], [0], [1], [0, 0, 1, 1], [], []>} : vector<2x32xf32>, vector<32x32xf32>, vector<2x32xf32> -> vector<2x32xf32>
    %12 = arith.addf %10, %11 : vector<2x32xf32>
    %13 = math.tanh %12 : vector<2x32xf32>
    %14 = vector.extract_strided_slice %3 {offsets = [0, 64], sizes = [2, 32], strides = [1, 1]} : vector<2x128xf32> to vector<2x32xf32>
    %cst_7 = arith.constant dense<0.000000e+00> : vector<2x32xf32>
    %15 = tpu.matmul %13, %4, %cst_7 {dimension_numbers = #tpu.dot_dimension_numbers<[1], [0], [0], [1], [0, 0, 1, 1], [], []>} : vector<2x32xf32>, vector<32x32xf32>, vector<2x32xf32> -> vector<2x32xf32>
    %16 = arith.addf %14, %15 : vector<2x32xf32>
    %17 = math.tanh %16 : vector<2x32xf32>
    %18 = vector.extract_strided_slice %3 {offsets = [0, 96], sizes = [2, 32], strides = [1, 1]} : vector<2x128xf32> to vector<2x32xf32>
    %cst_8 = arith.constant dense<0.000000e+00> : vector<2x32xf32>
    %19 = tpu.matmul %17, %4, %cst_8 {dimension_numbers = #tpu.dot_dimension_numbers<[1], [0], [0], [1], [0, 0, 1, 1], [], []>} : vector<2x32xf32>, vector<32x32xf32>, vector<2x32xf32> -> vector<2x32xf32>
    %20 = arith.addf %18, %19 : vector<2x32xf32>
    %21 = math.tanh %20 : vector<2x32xf32>
    %22 = tpu.concatenate %9, %13, %17, %21 in 1 : vector<2x32xf32>, vector<2x32xf32>, vector<2x32xf32>, vector<2x32xf32> -> vector<2x128xf32>
    %c0_9 = arith.constant 0 : index
    %c0_10 = arith.constant 0 : index
    %23 = vector.load %arg5[%c0_9, %c0_10] : memref<2x128xf32, #tpu.memory_space<vmem>>, vector<2x128xf32>
    tpu.vector_store %arg5[%c0_9, %c0_10], %22 {strides = array<i32>} : memref<2x128xf32, #tpu.memory_space<vmem>>, vector<2x128xf32>,
    %c0_11 = arith.constant 0 : index
    %c0_12 = arith.constant 0 : index
    %24 = vector.load %arg7[%c0_11, %c0_12] : memref<2x32xf32, #tpu.memory_space<vmem>>, vector<2x32xf32>
    tpu.vector_store %arg7[%c0_11, %c0_12], %21 {strides = array<i32>} : memref<2x32xf32, #tpu.memory_space<vmem>>, vector<2x32xf32>,
    %c1_i32 = arith.constant 1 : i32
    %25 = arith.cmpi eq, %arg1, %c1_i32 : i32
    %26 = arith.extui %25 : i1 to i32
    %c0_i32_13 = arith.constant 0 : i32
    %27 = arith.cmpi ne, %26, %c0_i32_13 : i32
    scf.if %27 {
      %c0_14 = arith.constant 0 : index
      %c0_15 = arith.constant 0 : index
      %28 = vector.load %arg6[%c0_14, %c0_15] : memref<2x32xf32, #tpu.memory_space<vmem>>, vector<2x32xf32>
      tpu.vector_store %arg6[%c0_14, %c0_15], %21 {strides = array<i32>} : memref<2x32xf32, #tpu.memory_space<vmem>>, vector<2x32xf32>,
    } else {
    }
    return
  }
  func.func @transform_0(%arg0: i32, %arg1: i32) -> (i32, i32) {
    %c0_i32 = arith.constant 0 : i32
    return %arg0, %arg1 : i32, i32
  }
  func.func @transform_1(%arg0: i32, %arg1: i32) -> (i32, i32) {
    %c0_i32 = arith.constant 0 : i32
    %c0_i32_0 = arith.constant 0 : i32
    %c0_i32_1 = arith.constant 0 : i32
    return %c0_i32, %c0_i32_0 : i32, i32
  }
  func.func @transform_2(%arg0: i32, %arg1: i32) -> (i32, i32) {
    %c0_i32 = arith.constant 0 : i32
    %c0_i32_0 = arith.constant 0 : i32
    return %arg0, %c0_i32 : i32, i32
  }
  func.func @transform_3(%arg0: i32, %arg1: i32) -> (i32, i32) {
    %c0_i32 = arith.constant 0 : i32
    return %arg0, %arg1 : i32, i32
  }
  func.func @transform_4(%arg0: i32, %arg1: i32) -> (i32, i32) {
    %c0_i32 = arith.constant 0 : i32
    %c0_i32_0 = arith.constant 0 : i32
    return %arg0, %c0_i32 : i32, i32
  }
}

</mosaic_0001>

<llo_original>
// kernel: tpu_custom_call.1
$region0: #{tpu_custom_call.1}
  #allocation0 [shape = 'u32[]', space=smem, size = 0x4, offset = 0x4, fixed_abs, tag = 'smem constant byte address 0x4 - core index']
  #allocation1 [shape = 'u32[144,128]{1,0:T(1,128)}', space=vmem, size = 0x12000, scoped, tag = 'internal scratch']
  #allocation2 [shape = 'f32[2,32]{1,0:T(2,128)}', space=vmem, size = 0x400, scoped, tag = 'scratch operand']
  %s0 = inlined_call_operand.hbm [shape: f32[2,256], index: 0, kind: input, shape index: {}]
  %s1 = inlined_call_operand.hbm [shape: f32[32,32], index: 1, kind: input, shape index: {}]
  %s2 = inlined_call_operand.vmem [shape: f32[2,32], index: 2, kind: input, shape index: {}]
  %s3 = inlined_call_operand.hbm [shape: f32[2,256], index: 3, kind: output, shape index: {0}]
  %s4 = inlined_call_operand.hbm [shape: f32[2,32], index: 4, kind: output, shape index: {1}]
  %5 = xla_tuple %s3, %s4
  %s6 = sld [smem:[#allocation0]]
  $region69: #{tpu_custom_call.1} parent=0
    _
  %s8 = ssub.s32 1, %s6
  %s9 = scalar_select 0, %s8, %s6
  $region1: #{tpu_custom_call.1} parent=0
    #allocation3 [shape = 'u8[2048]{0}', space=vmem, size = 0x800, scoped, tag = 'input window, operand 0']
    #allocation4 [shape = 's32[2]{0}', space=sflag, size = 0x8, scoped, tag = 'scoped memory for tpu_custom_call.1']
    #allocation5 [shape = 's32[2]{0}', space=sflag, size = 0x8, scoped, tag = 'scoped memory for tpu_custom_call.1']
    #allocation6 [shape = 'u8[16384]{0}', space=vmem, size = 0x4000, scoped, tag = 'input window, operand 1, single buffered']
    #allocation7 [shape = 's32[1]{0}', space=sflag, size = 0x4, scoped, tag = 'scoped memory for tpu_custom_call.1']
    #allocation8 [shape = 'u8[2048]{0}', space=vmem, size = 0x800, scoped, tag = 'output window, operand 0']
    #allocation9 [shape = 'u8[1024]{0}', space=vmem, size = 0x400, scoped, tag = 'output window, operand 1, single buffered']
    #allocation10 [shape = 's32[1]{0}', space=sflag, size = 0x4, scoped, tag = 'scoped memory for tpu_custom_call.1']
    %10 = vsyncpa [#allocation4], 0
    %s11 = scalar_lea.sflag [#allocation4], 1
    %12 = vsyncpa %s11, 0
    %13 = vsyncpa [#allocation7], 0
    %14 = vsyncpa [#allocation5], 0
    %s15 = scalar_lea.sflag [#allocation5], 1
    %16 = vsyncpa %s15, 0
    %17 = vsyncpa [#allocation10], 0
    loop: start=0, step=1, limit=4
    $region2: #{tpu_custom_call.1} parent=1 // loop_pre_header
      _
    $region3: #{tpu_custom_call.1} parent=1 // loop_header
      %s19 = sphi 0, %s23
      %p20 = scmp.ge.s32.totalorder %s19, 4
      %s26 = sphi 0, %s38
      %s27 = sphi 0, %s34
      %s28 = sphi 0, %s26
      %s29 = sphi 0, %s27
      %s30 = sphi 0, %s28
      %s31 = sphi 0, %s29
      %s43 = sphi 0, %s45
      %s46 = sphi 0, %s43
      %s47 = sphi 0, %s46
      %s63 = sphi 0, %s47
      %s67 = sphi 0, %s67
      %s69 = sphi 0, %s67
      %s70 = sphi 0, %s69
      %s84 = sphi 0, %s70
      %s90 = sphi 0, %s92
      %s93 = sphi 0, %s90
      %s94 = sphi 0, %s93
      %s110 = sphi 0, %s94
      %s118 = sphi 0, %s120
      %s121 = sphi 0, %s118
      %s122 = sphi 0, %s121
      %s138 = sphi 0, %s122
      %s144 = sphi 0, %s146
      %s147 = sphi 0, %s144
      %s148 = sphi 0, %s147
      %s164 = sphi 0, %s148
    $region4: #{tpu_custom_call.1} parent=1 // loop_header_branch
      %22 = sbr.rel (%p20) target = $region8
    $region5: #{tpu_custom_call.1} parent=1 // loop_body
      %s24 = ssub.s32 %s19, 1
      %s25 = ssub.s32 %s19, 2
      %s32 = sadd.s32 1, %s27
      %p33 = scmp.ge.s32.totalorder %s32, 2
      %s34 = scalar_select %p33, 0, %s32
      %s35 = sadd.s32 1, %s26
      %s36 = scalar_select %p33, %s35, %s26
      %p37 = scmp.ge.s32.totalorder %s36, 1
      %s38 = scalar_select %p37, 0, %s36
      %s39 = ssub.s32 %s26, %s38
      %s40 = ssub.s32 %s27, %s34
      %s41 = sor.u32 %s39, %s40
      %p42 = scmp.eq.s32.totalorder %s41, 0
      %s44 = sadd.s32 %s43, 1
      %s45 = scalar_select %p42, %s43, %s44
      %p48 = pneg %p42
      %p49 = scmp.eq.s32.totalorder %s19, 1
      %p50 = por %p48, %p49
      %p51 = scmp.ne.s32.totalorder %s43, %s46
      %p52 = scmp.eq.s32.totalorder %s19, 0
      %p53 = por %p51, %p52
      %p54 = scmp.ne.s32.totalorder %s43, %s46
      %p55 = scmp.eq.s32.totalorder %s24, 1
      %p56 = por %p54, %p55
      %p57 = scmp.ne.s32.totalorder %s46, %s47
      %p58 = scmp.eq.s32.totalorder %s24, 0
      %p59 = por %p57, %p58
      %p60 = scmp.ne.s32.totalorder %s46, %s47
      %p61 = scmp.eq.s32.totalorder %s25, 1
      %p62 = por %p60, %p61
      %p64 = scmp.ne.s32.totalorder %s47, %s63
      %p65 = scmp.eq.s32.totalorder %s25, 0
      %p66 = por %p64, %p65
      %s68 = sadd.s32 %s67, 1
      %p71 = scmp.eq.s32.totalorder %s19, 1
      %p72 = scmp.ne.s32.totalorder %s67, %s69
      %p73 = scmp.eq.s32.totalorder %s19, 0
      %p74 = por %p72, %p73
      %p75 = scmp.ne.s32.totalorder %s67, %s69
      %p76 = scmp.eq.s32.totalorder %s24, 1
      %p77 = por %p75, %p76
      %p78 = scmp.ne.s32.totalorder %s69, %s70
      %p79 = scmp.eq.s32.totalorder %s24, 0
      %p80 = por %p78, %p79
      %p81 = scmp.ne.s32.totalorder %s69, %s70
      %p82 = scmp.eq.s32.totalorder %s25, 1
      %p83 = por %p81, %p82
      %p85 = scmp.ne.s32.totalorder %s70, %s84
      %p86 = scmp.eq.s32.totalorder %s25, 0
      %p87 = por %p85, %p86
      %s88 = ssub.s32 %s26, %s38
      %p89 = scmp.eq.s32.totalorder %s88, 0
      %s91 = sadd.s32 %s90, 1
      %s92 = scalar_select %p89, %s90, %s91
      %p95 = pneg %p89
      %p96 = scmp.eq.s32.totalorder %s19, 1
      %p97 = por %p95, %p96
      %p98 = scmp.ne.s32.totalorder %s90, %s93
      %p99 = scmp.eq.s32.totalorder %s19, 0
      %p100 = por %p98, %p99
      %p101 = scmp.ne.s32.totalorder %s90, %s93
      %p102 = scmp.eq.s32.totalorder %s24, 1
      %p103 = por %p101, %p102
      %p104 = scmp.ne.s32.totalorder %s93, %s94
      %p105 = scmp.eq.s32.totalorder %s24, 0
      %p106 = por %p104, %p105
      %p107 = scmp.ne.s32.totalorder %s93, %s94
      %p108 = scmp.eq.s32.totalorder %s25, 1
      %p109 = por %p107, %p108
      %p111 = scmp.ne.s32.totalorder %s94, %s110
      %p112 = scmp.eq.s32.totalorder %s25, 0
      %p113 = por %p111, %p112
      %s114 = ssub.s32 %s26, %s38
      %s115 = ssub.s32 %s27, %s34
      %s116 = sor.u32 %s114, %s115
      %p117 = scmp.eq.s32.totalorder %s116, 0
      %s119 = sadd.s32 %s118, 1
      %s120 = scalar_select %p117, %s118, %s119
      %p123 = pneg %p117
      %p124 = scmp.eq.s32.totalorder %s19, 1
      %p125 = por %p123, %p124
      %p126 = scmp.ne.s32.totalorder %s118, %s121
      %p127 = scmp.eq.s32.totalorder %s19, 0
      %p128 = por %p126, %p127
      %p129 = scmp.ne.s32.totalorder %s118, %s121
      %p130 = scmp.eq.s32.totalorder %s24, 1
      %p131 = por %p129, %p130
      %p132 = scmp.ne.s32.totalorder %s121, %s122
      %p133 = scmp.eq.s32.totalorder %s24, 0
      %p134 = por %p132, %p133
      %p135 = scmp.ne.s32.totalorder %s121, %s122
      %p136 = scmp.eq.s32.totalorder %s25, 1
      %p137 = por %p135, %p136
      %p139 = scmp.ne.s32.totalorder %s122, %s138
      %p140 = scmp.eq.s32.totalorder %s25, 0
      %p141 = por %p139, %p140
      %s142 = ssub.s32 %s26, %s38
      %p143 = scmp.eq.s32.totalorder %s142, 0
      %s145 = sadd.s32 %s144, 1
      %s146 = scalar_select %p143, %s144, %s145
      %p149 = pneg %p143
      %p150 = scmp.eq.s32.totalorder %s19, 1
      %p151 = por %p149, %p150
      %p152 = scmp.ne.s32.totalorder %s144, %s147
      %p153 = scmp.eq.s32.totalorder %s19, 0
      %p154 = por %p152, %p153
      %p155 = scmp.ne.s32.totalorder %s144, %s147
      %p156 = scmp.eq.s32.totalorder %s24, 1
      %p157 = por %p155, %p156
      %p158 = scmp.ne.s32.totalorder %s147, %s148
      %p159 = scmp.eq.s32.totalorder %s24, 0
      %p160 = por %p158, %p159
      %p161 = scmp.ne.s32.totalorder %s147, %s148
      %p162 = scmp.eq.s32.totalorder %s25, 1
      %p163 = por %p161, %p162
      %p165 = scmp.ne.s32.totalorder %s148, %s164
      %p166 = scmp.eq.s32.totalorder %s25, 0
      %p167 = por %p165, %p166
      %p168 = scmp.le.s32.totalorder 1, %s19
      %p169 = scmp.lt.s32.totalorder %s19, 3
      %p170 = pnand %p168, %p169
      %p171 = pneg %p170
      // Predicated region
      $region9: #{tpu_custom_call.1} parent=5 // pred_check
        _
      $region10: #{tpu_custom_call.1} parent=5 // pred_check_branch
        %173 = sbr.rel (%p170) target = $region12
      $region11: #{tpu_custom_call.1} parent=5 // pred_region
        %s174 = ssub.s32 %s19, 1
        // Predicated region
        $region13: #{tpu_custom_call.1} parent=11 // pred_check
          %p175 = pneg %p80
        $region14: #{tpu_custom_call.1} parent=11 // pred_check_branch
          %177 = sbr.rel (%p175) target = $region16
        $region15: #{tpu_custom_call.1} parent=11 // pred_region
          %s179 = ssub.s32 512, 512
          %180 = vsyncadd [#allocation7], %s179
          %s181 = sshll.u32 [#allocation6], 4
          %s182 = int_to_ptr.vmem [resolvable:$true] %s181
          %187 = dma.hbm_to_vmem [thread:$0]  %s1, 512, %s182, [#allocation7], 128, 128, 8
        $region16: #{tpu_custom_call.1} parent=11 // pred_fallthru
          _
        // Predicated region
        $region17: #{tpu_custom_call.1} parent=11 // pred_check
          %p188 = pneg %p106
        $region18: #{tpu_custom_call.1} parent=11 // pred_check_branch
          %190 = sbr.rel (%p188) target = $region20
        $region19: #{tpu_custom_call.1} parent=11 // pred_region
          %p191 = scmp.lt.s32.totalorder %s28, 0
          %s192 = scalar_select %p191, %s28, 0
          %s193 = smul.addr %s192, 2
          %s194 = scalar_lea.vmem %s2, %s193
        $region20: #{tpu_custom_call.1} parent=11 // pred_fallthru
          _
      $region12: #{tpu_custom_call.1} parent=5 // pred_fallthru
        _
      %p195 = scmp.lt.s32.totalorder %s19, 2
      // Predicated region
      $region21: #{tpu_custom_call.1} parent=5 // pred_check
        %p196 = pneg %p195
      $region22: #{tpu_custom_call.1} parent=5 // pred_check_branch
        %198 = sbr.rel (%p196) target = $region24
      $region23: #{tpu_custom_call.1} parent=5 // pred_region
        // Predicated region
        $region25: #{tpu_custom_call.1} parent=23 // pred_check
          %p199 = pneg %p53
        $region26: #{tpu_custom_call.1} parent=23 // pred_check_branch
          %201 = sbr.rel (%p199) target = $region28
        $region27: #{tpu_custom_call.1} parent=23 // pred_region
          %s202 = sand.u32 %s43, 1
          %s203 = scalar_lea.sflag [#allocation4], %s202
          %s204 = sand.u32 %s43, 1
          %s205 = smul.addr %s204, 2
          %s206 = scalar_lea.vmem [#allocation3], %s205
          %s208 = ssub.s32 32, 32
          %209 = vsyncadd %s203, %s208
          %s210 = smul.addr %s26, 2
          %s211 = sadd.s32 %s27, %s210
          %s212 = smul.addr %s211, 32
          %s213 = scalar_lea.hbm %s0, %s212
          %s215 = sshll.u32 %s206, 4
          %s216 = int_to_ptr.vmem [resolvable:$true] %s215
          %218 = dma.hbm_to_vmem [thread:$0]  %s213, 32, %s216, %s203
        $region28: #{tpu_custom_call.1} parent=23 // pred_fallthru
          _
      $region24: #{tpu_custom_call.1} parent=5 // pred_fallthru
        _
      %p219 = scmp.le.s32.totalorder 1, %s19
      %p220 = scmp.lt.s32.totalorder %s19, 3
      %p221 = pnand %p219, %p220
      %p222 = pneg %p221
      // Predicated region
      $region29: #{tpu_custom_call.1} parent=5 // pred_check
        _
      $region30: #{tpu_custom_call.1} parent=5 // pred_check_branch
        %224 = sbr.rel (%p221) target = $region32
      $region31: #{tpu_custom_call.1} parent=5 // pred_region
        %s225 = ssub.s32 %s19, 1
        %s226 = sand.u32 %s46, 1
        %s227 = scalar_lea.sflag [#allocation4], %s226
        %s228 = sand.u32 %s46, 1
        %s229 = smul.addr %s228, 2
        %s230 = scalar_lea.vmem [#allocation3], %s229
        // Predicated region
        $region33: #{tpu_custom_call.1} parent=31 // pred_check
          %p231 = pneg %p59
        $region34: #{tpu_custom_call.1} parent=31 // pred_check_branch
          %233 = sbr.rel (%p231) target = $region36
        $region35: #{tpu_custom_call.1} parent=31 // pred_region
          %234 = dma.done %s227, 32
        $region36: #{tpu_custom_call.1} parent=31 // pred_fallthru
          _
        // Predicated region
        $region37: #{tpu_custom_call.1} parent=31 // pred_check
          %p235 = pneg %p80
        $region38: #{tpu_custom_call.1} parent=31 // pred_check_branch
          %237 = sbr.rel (%p235) target = $region40
        $region39: #{tpu_custom_call.1} parent=31 // pred_region
          %238 = dma.done [#allocation7], 512
        $region40: #{tpu_custom_call.1} parent=31 // pred_fallthru
          _
        %s239 = sand.u32 %s46, 1
        %s240 = scalar_lea.sflag [#allocation4], %s239
        %s241 = sand.u32 %s46, 1
        %s242 = smul.addr %s241, 2
        %s243 = scalar_lea.vmem [#allocation3], %s242
        %p244 = pneg %p59
        %p245 = pneg %p56
        %p246 = pneg %p80
        %p247 = pneg %p77
        %p248 = scmp.lt.s32.totalorder %s28, 0
        %s249 = scalar_select %p248, %s28, 0
        %s250 = smul.addr %s249, 2
        %s251 = scalar_lea.vmem %s2, %s250
        %p252 = pneg %p106
        %p253 = pneg %p103
        %p254 = pneg %p134
        %p255 = pneg %p131
        %s256 = sand.u32 %s121, 1
        %s257 = scalar_lea.sflag [#allocation5], %s256
        %s258 = sand.u32 %s121, 1
        %s259 = smul.addr %s258, 2
        %s260 = scalar_lea.vmem [#allocation8], %s259
        %p261 = pneg %p160
        %p262 = pneg %p157
        %p263 = scmp.lt.s32.totalorder %s28, 0
        %s264 = scalar_select %p263, %s28, 0
        %s265 = smul.addr %s264, 2
        %s266 = scalar_lea.vmem %s2, %s265
        %p267 = scmp.eq.s32.totalorder %s29, 0
        // Predicated region
        $region41: #{tpu_custom_call.1} parent=31 // pred_check
          %p268 = pneg %p267
        $region42: #{tpu_custom_call.1} parent=31 // pred_check_branch
          %270 = sbr.rel (%p268) target = $region44
        $region43: #{tpu_custom_call.1} parent=31 // pred_region
          %v271 = vld [vmem:[%s266] sm:$0x3]
          %vm272 = vcmask 254976
          %273 = vst.msk [vmem:[#allocation2] sm:$0x3] %vm272, %v271
        $region44: #{tpu_custom_call.1} parent=31 // pred_fallthru
          _
        %v274 = vld [vmem:[%s230] sm:$0x3]
        %v275 = vld [vmem:[#allocation6] sm:$0xff]
        %v276 = vld [vmem:[#allocation6 + $0x8] sm:$0xff]
        %v277 = vld [vmem:[#allocation6 + $0x10] sm:$0xff]
        %v278 = vld [vmem:[#allocation6 + $0x18] sm:$0xff]
        %v279 = vld [vmem:[#allocation2] sm:$0x3]
        %vm280 = vcmask 261120
        %v282 = vsel %vm280, %v279, 0
        %284 = vmatprep.subr.mxu0 0.0
        %285 = vmatpush1.msra.mxu0 %v275
        %286 = vmatprep.subr.mxu0 0.0
        %287 = vmatpush1.msra.mxu0 %v276
        %288 = vmatprep.subr.mxu0 0.0
        %289 = vmatpush1.msra.mxu0 %v277
        %290 = vmatprep.subr.mxu0 0.0
        %291 = vmatpush1.msra.mxu0 %v278
        %292 = vmatprep.subr.mxu0 0.0
        %293 = vmatpush1.msra.mxu0 0.0
        %294 = vmatprep.subr.mxu0 0.0
        %295 = vmatpush1.msra.mxu0 0.0
        %296 = vmatprep.subr.mxu0 0.0
        %297 = vmatpush1.msra.mxu0 0.0
        %298 = vmatprep.subr.mxu0 0.0
        %299 = vmatpush1.msra.mxu0 0.0
        %300 = vmatprep.subr.mxu0 0.0
        %301 = vmatpush1.msra.mxu0 0.0
        %302 = vmatprep.subr.mxu0 0.0
        %303 = vmatpush1.msra.mxu0 0.0
        %304 = vmatprep.subr.mxu0 0.0
        %305 = vmatpush1.msra.mxu0 0.0
        %306 = vmatprep.subr.mxu0 0.0
        %307 = vmatpush1.msra.mxu0 0.0
        %308 = vmatprep.subr.mxu0 0.0
        %309 = vmatpush1.msra.mxu0 0.0
        %310 = vmatprep.subr.mxu0 0.0
        %311 = vmatpush1.msra.mxu0 0.0
        %312 = vmatprep.subr.mxu0 0.0
        %313 = vmatpush1.msra.mxu0 0.0
        %314 = vmatprep.subr.mxu0 0.0
        %315 = vmatpush1.msra.mxu0 0.0
        %316 = vmatprep.subr.mxu0 0.0
        %317 = vmatpush1.msra.mxu0 0.0
        %318 = vmatprep.subr.mxu0 0.0
        %319 = vmatpush1.msra.mxu0 0.0
        %320 = vmatprep.subr.mxu0 0.0
        %321 = vmatpush1.msra.mxu0 0.0
        %322 = vmatprep.subr.mxu0 0.0
        %323 = vmatpush1.msra.mxu0 0.0
        %324 = vmatprep.subr.mxu0 0.0
        %325 = vmatpush1.msra.mxu0 0.0
        %326 = vmatprep.subr.mxu0 0.0
        %327 = vmatpush1.msra.mxu0 0.0
        %328 = vmatprep.subr.mxu0 0.0
        %329 = vmatpush1.msra.mxu0 0.0
        %330 = vmatprep.subr.mxu0 0.0
        %331 = vmatpush1.msra.mxu0 0.0
        %332 = vmatprep.subr.mxu0 0.0
        %333 = vmatpush1.msra.mxu0 0.0
        %334 = vmatprep.subr.mxu0 0.0
        %335 = vmatpush1.msra.mxu0 0.0
        %336 = vmatprep.subr.mxu0 0.0
        %337 = vmatpush1.msra.mxu0 0.0
        %338 = vmatprep.subr.mxu0 0.0
        %339 = vmatpush1.msra.mxu0 0.0
        %340 = vmatprep.subr.mxu0 0.0
        %341 = vmatpush1.msra.mxu0 0.0
        %342 = vmatprep.subr.mxu0 0.0
        %343 = vmatpush1.msra.mxu0 0.0
        %344 = vmatprep.subr.mxu0 0.0
        %345 = vmatpush1.msra.mxu0 0.0
        %346 = vmatprep.subr.mxu0 0.0
        %347 = vmatpush1.msra.mxu0 0.0
        %348 = vmatprep.mubr.f32.mxu0 0.0
        %349 = vmatmul.mubr.f32.gmra.mrb[0].mxu0 %v282
        %v350 = vpop.f32.mrb[0].mxu0
        %v351 = vadd.f32 0.0, %v350
        %v352 = vpop.f32.mrb[0].mxu0
        %353 = vdwg.mxu0
        %v354 = vadd.f32 %v274, %v351
        %v355 = vtanh.pop %v354
        %v357 = vsel %vm280, %v355, 0
        %359 = vmatprep.subr.mxu0 0.0
        %360 = vmatpush1.msra.mxu0 %v275
        %361 = vmatprep.subr.mxu0 0.0
        %362 = vmatpush1.msra.mxu0 %v276
        %363 = vmatprep.subr.mxu0 0.0
        %364 = vmatpush1.msra.mxu0 %v277
        %365 = vmatprep.subr.mxu0 0.0
        %366 = vmatpush1.msra.mxu0 %v278
        %367 = vmatprep.subr.mxu0 0.0
        %368 = vmatpush1.msra.mxu0 0.0
        %369 = vmatprep.subr.mxu0 0.0
        %370 = vmatpush1.msra.mxu0 0.0
        %371 = vmatprep.subr.mxu0 0.0
        %372 = vmatpush1.msra.mxu0 0.0
        %373 = vmatprep.subr.mxu0 0.0
        %374 = vmatpush1.msra.mxu0 0.0
        %375 = vmatprep.subr.mxu0 0.0
        %376 = vmatpush1.msra.mxu0 0.0
        %377 = vmatprep.subr.mxu0 0.0
        %378 = vmatpush1.msra.mxu0 0.0
        %379 = vmatprep.subr.mxu0 0.0
        %380 = vmatpush1.msra.mxu0 0.0
        %381 = vmatprep.subr.mxu0 0.0
        %382 = vmatpush1.msra.mxu0 0.0
        %383 = vmatprep.subr.mxu0 0.0
        %384 = vmatpush1.msra.mxu0 0.0
        %385 = vmatprep.subr.mxu0 0.0
        %386 = vmatpush1.msra.mxu0 0.0
        %387 = vmatprep.subr.mxu0 0.0
        %388 = vmatpush1.msra.mxu0 0.0
        %389 = vmatprep.subr.mxu0 0.0
        %390 = vmatpush1.msra.mxu0 0.0
        %391 = vmatprep.subr.mxu0 0.0
        %392 = vmatpush1.msra.mxu0 0.0
        %393 = vmatprep.subr.mxu0 0.0
        %394 = vmatpush1.msra.mxu0 0.0
        %395 = vmatprep.subr.mxu0 0.0
        %396 = vmatpush1.msra.mxu0 0.0
        %397 = vmatprep.subr.mxu0 0.0
        %398 = vmatpush1.msra.mxu0 0.0
        %399 = vmatprep.subr.mxu0 0.0
        %400 = vmatpush1.msra.mxu0 0.0
        %401 = vmatprep.subr.mxu0 0.0
        %402 = vmatpush1.msra.mxu0 0.0
        %403 = vmatprep.subr.mxu0 0.0
        %404 = vmatpush1.msra.mxu0 0.0
        %405 = vmatprep.subr.mxu0 0.0
        %406 = vmatpush1.msra.mxu0 0.0
        %407 = vmatprep.subr.mxu0 0.0
        %408 = vmatpush1.msra.mxu0 0.0
        %409 = vmatprep.subr.mxu0 0.0
        %410 = vmatpush1.msra.mxu0 0.0
        %411 = vmatprep.subr.mxu0 0.0
        %412 = vmatpush1.msra.mxu0 0.0
        %413 = vmatprep.subr.mxu0 0.0
        %414 = vmatpush1.msra.mxu0 0.0
        %415 = vmatprep.subr.mxu0 0.0
        %416 = vmatpush1.msra.mxu0 0.0
        %417 = vmatprep.subr.mxu0 0.0
        %418 = vmatpush1.msra.mxu0 0.0
        %419 = vmatprep.subr.mxu0 0.0
        %420 = vmatpush1.msra.mxu0 0.0
        %421 = vmatprep.subr.mxu0 0.0
        %422 = vmatpush1.msra.mxu0 0.0
        %423 = vmatprep.mubr.f32.mxu0 0.0
        %424 = vmatmul.mubr.f32.gmra.mrb[0].mxu0 %v357
        %v425 = vpop.f32.mrb[0].mxu0
        %v426 = vadd.f32 0.0, %v425
        %v427 = vpop.f32.mrb[0].mxu0
        %428 = vdwg.mxu0
        %430 = vrot.lane.b32.xlu0 %v426, 32
        %v431 = vpop.permute.xlu0 %430
        %v433 = vadd.f32 %v274, %v431
        %v434 = vtanh.pop %v433
        %436 = vrot.lane.b32.xlu0 %v434, 96
        %v437 = vpop.permute.xlu0 %436
        %v438 = vsel %vm280, %v437, 0
        %440 = vmatprep.subr.mxu0 0.0
        %441 = vmatpush1.msra.mxu0 %v275
        %442 = vmatprep.subr.mxu0 0.0
        %443 = vmatpush1.msra.mxu0 %v276
        %444 = vmatprep.subr.mxu0 0.0
        %445 = vmatpush1.msra.mxu0 %v277
        %446 = vmatprep.subr.mxu0 0.0
        %447 = vmatpush1.msra.mxu0 %v278
        %448 = vmatprep.subr.mxu0 0.0
        %449 = vmatpush1.msra.mxu0 0.0
        %450 = vmatprep.subr.mxu0 0.0
        %451 = vmatpush1.msra.mxu0 0.0
        %452 = vmatprep.subr.mxu0 0.0
        %453 = vmatpush1.msra.mxu0 0.0
        %454 = vmatprep.subr.mxu0 0.0
        %455 = vmatpush1.msra.mxu0 0.0
        %456 = vmatprep.subr.mxu0 0.0
        %457 = vmatpush1.msra.mxu0 0.0
        %458 = vmatprep.subr.mxu0 0.0
        %459 = vmatpush1.msra.mxu0 0.0
        %460 = vmatprep.subr.mxu0 0.0
        %461 = vmatpush1.msra.mxu0 0.0
        %462 = vmatprep.subr.mxu0 0.0
        %463 = vmatpush1.msra.mxu0 0.0
        %464 = vmatprep.subr.mxu0 0.0
        %465 = vmatpush1.msra.mxu0 0.0
        %466 = vmatprep.subr.mxu0 0.0
        %467 = vmatpush1.msra.mxu0 0.0
        %468 = vmatprep.subr.mxu0 0.0
        %469 = vmatpush1.msra.mxu0 0.0
        %470 = vmatprep.subr.mxu0 0.0
        %471 = vmatpush1.msra.mxu0 0.0
        %472 = vmatprep.subr.mxu0 0.0
        %473 = vmatpush1.msra.mxu0 0.0
        %474 = vmatprep.subr.mxu0 0.0
        %475 = vmatpush1.msra.mxu0 0.0
        %476 = vmatprep.subr.mxu0 0.0
        %477 = vmatpush1.msra.mxu0 0.0
        %478 = vmatprep.subr.mxu0 0.0
        %479 = vmatpush1.msra.mxu0 0.0
        %480 = vmatprep.subr.mxu0 0.0
        %481 = vmatpush1.msra.mxu0 0.0
        %482 = vmatprep.subr.mxu0 0.0
        %483 = vmatpush1.msra.mxu0 0.0
        %484 = vmatprep.subr.mxu0 0.0
        %485 = vmatpush1.msra.mxu0 0.0
        %486 = vmatprep.subr.mxu0 0.0
        %487 = vmatpush1.msra.mxu0 0.0
        %488 = vmatprep.subr.mxu0 0.0
        %489 = vmatpush1.msra.mxu0 0.0
        %490 = vmatprep.subr.mxu0 0.0
        %491 = vmatpush1.msra.mxu0 0.0
        %492 = vmatprep.subr.mxu0 0.0
        %493 = vmatpush1.msra.mxu0 0.0
        %494 = vmatprep.subr.mxu0 0.0
        %495 = vmatpush1.msra.mxu0 0.0
        %496 = vmatprep.subr.mxu0 0.0
        %497 = vmatpush1.msra.mxu0 0.0
        %498 = vmatprep.subr.mxu0 0.0
        %499 = vmatpush1.msra.mxu0 0.0
        %500 = vmatprep.subr.mxu0 0.0
        %501 = vmatpush1.msra.mxu0 0.0
        %502 = vmatprep.subr.mxu0 0.0
        %503 = vmatpush1.msra.mxu0 0.0
        %504 = vmatprep.mubr.f32.mxu0 0.0
        %505 = vmatmul.mubr.f32.gmra.mrb[0].mxu0 %v438
        %v506 = vpop.f32.mrb[0].mxu0
        %v507 = vadd.f32 0.0, %v506
        %v508 = vpop.f32.mrb[0].mxu0
        %509 = vdwg.mxu0
        %511 = vrot.lane.b32.xlu0 %v507, 64
        %v512 = vpop.permute.xlu0 %511
        %v514 = vadd.f32 %v274, %v512
        %v515 = vtanh.pop %v514
        %517 = vrot.lane.b32.xlu0 %v515, 64
        %v518 = vpop.permute.xlu0 %517
        %v519 = vsel %vm280, %v518, 0
        %521 = vmatprep.subr.mxu0 0.0
        %522 = vmatpush1.msra.mxu0 %v275
        %523 = vmatprep.subr.mxu0 0.0
        %524 = vmatpush1.msra.mxu0 %v276
        %525 = vmatprep.subr.mxu0 0.0
        %526 = vmatpush1.msra.mxu0 %v277
        %527 = vmatprep.subr.mxu0 0.0
        %528 = vmatpush1.msra.mxu0 %v278
        %529 = vmatprep.subr.mxu0 0.0
        %530 = vmatpush1.msra.mxu0 0.0
        %531 = vmatprep.subr.mxu0 0.0
        %532 = vmatpush1.msra.mxu0 0.0
        %533 = vmatprep.subr.mxu0 0.0
        %534 = vmatpush1.msra.mxu0 0.0
        %535 = vmatprep.subr.mxu0 0.0
        %536 = vmatpush1.msra.mxu0 0.0
        %537 = vmatprep.subr.mxu0 0.0
        %538 = vmatpush1.msra.mxu0 0.0
        %539 = vmatprep.subr.mxu0 0.0
        %540 = vmatpush1.msra.mxu0 0.0
        %541 = vmatprep.subr.mxu0 0.0
        %542 = vmatpush1.msra.mxu0 0.0
        %543 = vmatprep.subr.mxu0 0.0
        %544 = vmatpush1.msra.mxu0 0.0
        %545 = vmatprep.subr.mxu0 0.0
        %546 = vmatpush1.msra.mxu0 0.0
        %547 = vmatprep.subr.mxu0 0.0
        %548 = vmatpush1.msra.mxu0 0.0
        %549 = vmatprep.subr.mxu0 0.0
        %550 = vmatpush1.msra.mxu0 0.0
        %551 = vmatprep.subr.mxu0 0.0
        %552 = vmatpush1.msra.mxu0 0.0
        %553 = vmatprep.subr.mxu0 0.0
        %554 = vmatpush1.msra.mxu0 0.0
        %555 = vmatprep.subr.mxu0 0.0
        %556 = vmatpush1.msra.mxu0 0.0
        %557 = vmatprep.subr.mxu0 0.0
        %558 = vmatpush1.msra.mxu0 0.0
        %559 = vmatprep.subr.mxu0 0.0
        %560 = vmatpush1.msra.mxu0 0.0
        %561 = vmatprep.subr.mxu0 0.0
        %562 = vmatpush1.msra.mxu0 0.0
        %563 = vmatprep.subr.mxu0 0.0
        %564 = vmatpush1.msra.mxu0 0.0
        %565 = vmatprep.subr.mxu0 0.0
        %566 = vmatpush1.msra.mxu0 0.0
        %567 = vmatprep.subr.mxu0 0.0
        %568 = vmatpush1.msra.mxu0 0.0
        %569 = vmatprep.subr.mxu0 0.0
        %570 = vmatpush1.msra.mxu0 0.0
        %571 = vmatprep.subr.mxu0 0.0
        %572 = vmatpush1.msra.mxu0 0.0
        %573 = vmatprep.subr.mxu0 0.0
        %574 = vmatpush1.msra.mxu0 0.0
        %575 = vmatprep.subr.mxu0 0.0
        %576 = vmatpush1.msra.mxu0 0.0
        %577 = vmatprep.subr.mxu0 0.0
        %578 = vmatpush1.msra.mxu0 0.0
        %579 = vmatprep.subr.mxu0 0.0
        %580 = vmatpush1.msra.mxu0 0.0
        %581 = vmatprep.subr.mxu0 0.0
        %582 = vmatpush1.msra.mxu0 0.0
        %583 = vmatprep.subr.mxu0 0.0
        %584 = vmatpush1.msra.mxu0 0.0
        %585 = vmatprep.mubr.f32.mxu0 0.0
        %586 = vmatmul.mubr.f32.gmra.mrb[0].mxu0 %v519
        %v587 = vpop.f32.mrb[0].mxu0
        %v588 = vadd.f32 0.0, %v587
        %v589 = vpop.f32.mrb[0].mxu0
        %590 = vdwg.mxu0
        %592 = vrot.lane.b32.xlu0 %v588, 96
        %v593 = vpop.permute.xlu0 %592
        %v595 = vadd.f32 %v274, %v593
        %v596 = vtanh.pop %v595
        %v597 = vsel %vm280, %v355, %v434
        %vm598 = vcmask 523264
        %v599 = vsel %vm598, %v597, %v515
        %vm600 = vcmask 785408
        %v601 = vsel %vm600, %v599, %v596
        %602 = vst [vmem:[%s260] sm:$0x3] %v601
        %604 = vrot.lane.b32.xlu0 %v596, 32
        %v605 = vpop.permute.xlu0 %604
        %vm607 = vcmask 254976
        %608 = vst.msk [vmem:[#allocation2] sm:$0x3] %vm607, %v605
        %p609 = scmp.eq.s32.totalorder %s29, 1
        // Predicated region
        $region45: #{tpu_custom_call.1} parent=31 // pred_check
          %p610 = pneg %p609
        $region46: #{tpu_custom_call.1} parent=31 // pred_check_branch
          %612 = sbr.rel (%p610) target = $region48
        $region47: #{tpu_custom_call.1} parent=31 // pred_region
          %613 = vst.msk [vmem:[#allocation9] sm:$0x3] %vm607, %v605
        $region48: #{tpu_custom_call.1} parent=31 // pred_fallthru
          _
        %s614 = sand.u32 %s121, 1
        %s615 = scalar_lea.sflag [#allocation5], %s614
        %s616 = sand.u32 %s121, 1
        %s617 = smul.addr %s616, 2
        %s618 = scalar_lea.vmem [#allocation8], %s617
        // Predicated region
        $region49: #{tpu_custom_call.1} parent=31 // pred_check
          %p619 = pneg %p131
        $region50: #{tpu_custom_call.1} parent=31 // pred_check_branch
          %621 = sbr.rel (%p619) target = $region52
        $region51: #{tpu_custom_call.1} parent=31 // pred_region
          %s623 = ssub.s32 32, 32
          %624 = vsyncadd %s615, %s623
          %s625 = smul.addr %s28, 2
          %s626 = sadd.s32 %s29, %s625
          %s627 = smul.addr %s626, 32
          %s628 = scalar_lea.hbm %s3, %s627
          %s630 = sshll.u32 %s618, 4
          %s631 = int_to_ptr.vmem [resolvable:$true] %s630
          %633 = dma.vmem_to_hbm [thread:$0]  %s631, 32, %s628, %s615
        $region52: #{tpu_custom_call.1} parent=31 // pred_fallthru
          _
        // Predicated region
        $region53: #{tpu_custom_call.1} parent=31 // pred_check
          %p634 = pneg %p157
        $region54: #{tpu_custom_call.1} parent=31 // pred_check_branch
          %636 = sbr.rel (%p634) target = $region56
        $region55: #{tpu_custom_call.1} parent=31 // pred_region
          %s638 = ssub.s32 32, 32
          %639 = vsyncadd [#allocation10], %s638
          %s640 = smul.addr %s28, 32
          %s641 = scalar_lea.hbm %s4, %s640
          %s643 = sshll.u32 [#allocation9], 4
          %s644 = int_to_ptr.vmem [resolvable:$true] %s643
          %646 = dma.vmem_to_hbm [thread:$0]  %s644, 32, %s641, [#allocation10]
        $region56: #{tpu_custom_call.1} parent=31 // pred_fallthru
          _
        // Predicated region
        $region57: #{tpu_custom_call.1} parent=31 // pred_check
          %p647 = pneg %p157
        $region58: #{tpu_custom_call.1} parent=31 // pred_check_branch
          %649 = sbr.rel (%p647) target = $region60
        $region59: #{tpu_custom_call.1} parent=31 // pred_region
          %650 = dma.done [#allocation10], 32
        $region60: #{tpu_custom_call.1} parent=31 // pred_fallthru
          _
      $region32: #{tpu_custom_call.1} parent=5 // pred_fallthru
        _
      %p651 = scmp.le.s32.totalorder 2, %s19
      // Predicated region
      $region61: #{tpu_custom_call.1} parent=5 // pred_check
        %p652 = pneg %p651
      $region62: #{tpu_custom_call.1} parent=5 // pred_check_branch
        %654 = sbr.rel (%p652) target = $region64
      $region63: #{tpu_custom_call.1} parent=5 // pred_region
        %s655 = ssub.s32 %s19, 2
        // Predicated region
        $region65: #{tpu_custom_call.1} parent=63 // pred_check
          %p656 = pneg %p137
        $region66: #{tpu_custom_call.1} parent=63 // pred_check_branch
          %658 = sbr.rel (%p656) target = $region68
        $region67: #{tpu_custom_call.1} parent=63 // pred_region
          %s659 = sand.u32 %s122, 1
          %s660 = scalar_lea.sflag [#allocation5], %s659
          %s661 = sand.u32 %s122, 1
          %s662 = smul.addr %s661, 2
          %s663 = scalar_lea.vmem [#allocation8], %s662
          %664 = dma.done %s660, 32
        $region68: #{tpu_custom_call.1} parent=63 // pred_fallthru
          _
      $region64: #{tpu_custom_call.1} parent=5 // pred_fallthru
        _
    $region6: #{tpu_custom_call.1} parent=1 // loop_footer
      %s23 = sadd.s32 1, %s19
    $region7: #{tpu_custom_call.1} parent=1 // loop_footer_branch
      %18 = sbr.rel target = $region3
    $region8: #{tpu_custom_call.1} parent=1 // loop_exit
      _
    %665 = vsyncpa [#allocation4], 1
    %s666 = scalar_lea.sflag [#allocation4], 1
    %667 = vsyncpa %s666, 1
    %668 = vsyncpa [#allocation7], 1
    %669 = vsyncpa [#allocation5], 1
    %s670 = scalar_lea.sflag [#allocation5], 1
    %671 = vsyncpa %s670, 1
    %672 = vsyncpa [#allocation10], 1

</llo_original>
